<compile_context>
chip_gen: v7x
topology: tpu7x:2x2x1
jax: 0.10.0
libtpu: 0.0.40
codegen_flags: <defaults>
</compile_context>

<pallas_src>
import functools

import jax
import jax.numpy as jnp
from jax import lax
from jax.experimental import pallas as pl
from jax.experimental.pallas import tpu as pltpu

_GOLDEN = 0x9E3779B9
_MIXER = 0x045D9F3B


def _round_up(x: int, m: int) -> int:
    return ((x + m - 1) // m) * m


def _hash_to_tokens(mix_u32, low, high, max_len, use_eos, pos_i32):
    """Shared hash -> token map (used by both the Pallas kernel and XLA path)."""
    h = mix_u32
    h = (h ^ (h >> 16)) * jnp.uint32(_MIXER)
    h = (h ^ (h >> 16)) * jnp.uint32(_MIXER)
    h = h ^ (h >> 16)
    r = (h & jnp.uint32(0x7FFFFFFF)).astype(jnp.int32)           # non-negative
    u = r.astype(jnp.float32) * jnp.float32(1.0 / 2147483648.0)  # [0, 1]
    rng = high - low
    off = (u * jnp.float32(rng)).astype(jnp.int32)               # floor (u >= 0)
    # Load-bearing clamp: u can round up to exactly 1.0 for r = 2^31 - 1.
    off = jnp.minimum(off, jnp.int32(rng - 1))
    tok = jnp.int32(low) + off
    if use_eos:
        tok = jnp.where(pos_i32 < max_len, tok, jnp.int32(0))    # EOS slot -> id 0
    return tok


def _random_sender_kernel(seed_ref, tok_ref, *, max_len, use_eos, low, high):
    """seed_ref: (1, TB) uint32 seeds (lane-dense); tok_ref: (L1, TB) int32 ids."""
    L1, TB = tok_ref.shape
    # Message-position index along sublanes; batch is on the 128-lane axis.
    pos = lax.broadcasted_iota(jnp.int32, (L1, TB), 0)
    # Stateless hash of (seed, position); the (1, TB) seed row broadcasts
    # implicitly across sublanes -> pure straight-line VPU work.
    mix = seed_ref[...] + pos.astype(jnp.uint32) * jnp.uint32(_GOLDEN)
    tok_ref[...] = _hash_to_tokens(mix, low, high, max_len, use_eos, pos)


def _random_sender_tokens_pallas(seeds, *, L1, max_len, use_eos, low, high):
    """seeds: (B,) uint32 -> (B, L1) int32 token ids via the Pallas kernel."""
    B = seeds.shape[0]
    B128 = _round_up(B, 128)
    # Chunk size: big chunks amortize ~0.35 us/step grid overhead; keep >=2
    # grid steps for large batches so v7x megacore can shard the batch axis.
    if B128 <= 256:
        TB = B128
    else:
        TB = min(8192, _round_up(-(-B128 // 2), 128))
    B_pad = _round_up(B128, TB)
    if B_pad != B:
        seeds = jnp.pad(seeds, (0, B_pad - B))
    seeds_row = seeds.reshape(1, B_pad)

    kernel = functools.partial(
        _random_sender_kernel, max_len=max_len, use_eos=use_eos, low=low, high=high
    )
    tokens_t = pl.pallas_call(
        kernel,
        out_shape=jax.ShapeDtypeStruct((L1, B_pad), jnp.int32),
        grid_spec=pl.GridSpec(
            grid=(B_pad // TB,),
            in_specs=[pl.BlockSpec((1, TB), lambda i: (0, i))],
            out_specs=pl.BlockSpec((L1, TB), lambda i: (0, i)),
        ),
        compiler_params=pltpu.CompilerParams(
            dimension_semantics=("parallel",),  # steps independent; v7x-friendly
        ),
    )(seeds_row)
    # Transpose to (B, L1) in XLA (tiny, fuses with the one_hot downstream).
    return tokens_t[:, :B].T


@functools.partial(
    jax.jit,
    static_argnames=("vocab_size", "max_len", "use_eos_token", "xla_fallback_max_batch"),
)
def random_sender_forward(
    img, *, vocab_size, max_len, use_eos_token=True, xla_fallback_max_batch=512
):
    """img: (B, C, H, W) float array. Returns (B, L, vocab_size) float32 one-hot."""
    B = img.shape[0]
    L1 = max_len + (1 if use_eos_token else 0)
    low = 1 if use_eos_token else 0          # legal_vocab_subsets=None path
    high = vocab_size

    # Hoisted seed computation: one fused XLA batch reduction (the real HBM
    # roofline); the kernel never touches the images.
    sums = jnp.sum(img.reshape(B, -1).astype(jnp.float32), axis=1)
    seeds_i32 = (sums * 1000.0).astype(jnp.int32)                # int(x.sum()*1000)
    seeds = lax.bitcast_convert_type(seeds_i32, jnp.uint32)      # (B,)

    pos = jnp.arange(L1, dtype=jnp.int32)

    if B <= xla_fallback_max_batch:
        # Small-batch path: ~10 elementwise ops that XLA fuses with the seed
        # reduction and the one_hot; beats the Mosaic custom-call overhead.
        mix = seeds[:, None] + pos.astype(jnp.uint32)[None, :] * jnp.uint32(_GOLDEN)
        tokens = _hash_to_tokens(mix, low, high, max_len, use_eos_token, pos[None, :])
    else:
        tokens = _random_sender_tokens_pallas(
            seeds, L1=L1, max_len=max_len, use_eos=use_eos_token, low=low, high=high
        )

    # 'gs' discretization: one-hot encode in XLA (fuses into the consumer).
    return jax.nn.one_hot(tokens, vocab_size, dtype=jnp.float32)


if __name__ == "__main__":
    # Module config: RandomSender(vocab_size=16, max_len=8, 'gs',
    #                             legal_vocab_subsets=None, use_eos_token=True,
    #                             num_unique_messages=None)
    VOCAB_SIZE = 16
    MAX_LEN = 8
    USE_EOS = True

    key = jax.random.PRNGKey(0)
    img = jax.random.normal(key, (2, 4, 16, 16), dtype=jnp.float32)  # NCHW

    # Force the Pallas path (fallback threshold 0) so the kernel actually runs.
    out = random_sender_forward(
        img, vocab_size=VOCAB_SIZE, max_len=MAX_LEN, use_eos_token=USE_EOS,
        xla_fallback_max_batch=0,
    )
    out = jax.block_until_ready(out)

    # Pure-XLA fallback (default threshold) must agree bit-exactly.
    ref = jax.block_until_ready(
        random_sender_forward(
            img, vocab_size=VOCAB_SIZE, max_len=MAX_LEN, use_eos_token=USE_EOS
        )
    )

    # Basic sanity checks.
    assert out.shape == (2, MAX_LEN + 1, VOCAB_SIZE)
    assert out.dtype == jnp.float32
    # each position is a valid one-hot
    assert bool(jnp.all(jnp.sum(out, axis=-1) == 1.0))
    # EOS row is token 0
    assert bool(jnp.all(out[:, -1, 0] == 1.0))
    # tokens (non-EOS) are in [1, vocab_size), i.e. never token 0
    assert bool(jnp.all(out[:, :MAX_LEN, 0] == 0.0))
    # Pallas path == fused XLA path
    assert bool(jnp.all(out == ref))
    # determinism: same input -> same message
    out2 = jax.block_until_ready(
        random_sender_forward(
            img, vocab_size=VOCAB_SIZE, max_len=MAX_LEN, use_eos_token=USE_EOS,
            xla_fallback_max_batch=0,
        )
    )
    assert bool(jnp.all(out == out2))

    print("KERNEL_OK")
</pallas_src>

<mosaic_0001>
module attributes {stable_mosaic.version = 11 : i64} {
  func.func @_random_sender_kernel(%arg0: i32, %arg1: memref<1x128xi32, #tpu.memory_space<vmem>>, %arg2: memref<9x128xi32, #tpu.memory_space<vmem>>) attributes {dimension_semantics = [#tpu.dimension_semantics<parallel>], iteration_bounds = array<i64: 1>, scalar_prefetch = 0 : i64, scratch_operands = 0 : i64, tpu.core_type = #tpu.core_type<tc>, window_params = [{transform_indices = @transform_0, window_bounds = array<i64: 1, 128>}, {transform_indices = @transform_1, window_bounds = array<i64: 9, 128>}]} {
    %0 = tpu.iota {dimensions = array<i32: 0>} : vector<9x128xi32>
    %c0 = arith.constant 0 : index
    %c0_0 = arith.constant 0 : index
    %1 = vector.load %arg1[%c0, %c0_0] : memref<1x128xi32, #tpu.memory_space<vmem>>, vector<1x128xi32>
    %c-1640531527_i32 = arith.constant -1640531527 : i32
    %2 = vector.broadcast %c-1640531527_i32 : i32 to vector<9x128xi32>
    %3 = arith.muli %0, %2 : vector<9x128xi32>
    %4 = vector.broadcast %1 : vector<1x128xi32> to vector<9x128xi32>
    %5 = arith.addi %4, %3 : vector<9x128xi32>
    %c16_i32 = arith.constant 16 : i32
    %6 = vector.broadcast %c16_i32 : i32 to vector<9x128xi32>
    %7 = arith.shrui %5, %6 : vector<9x128xi32>
    %8 = arith.xori %5, %7 : vector<9x128xi32>
    %c73244475_i32 = arith.constant 73244475 : i32
    %9 = vector.broadcast %c73244475_i32 : i32 to vector<9x128xi32>
    %10 = arith.muli %8, %9 : vector<9x128xi32>
    %c16_i32_1 = arith.constant 16 : i32
    %11 = vector.broadcast %c16_i32_1 : i32 to vector<9x128xi32>
    %12 = arith.shrui %10, %11 : vector<9x128xi32>
    %13 = arith.xori %10, %12 : vector<9x128xi32>
    %c73244475_i32_2 = arith.constant 73244475 : i32
    %14 = vector.broadcast %c73244475_i32_2 : i32 to vector<9x128xi32>
    %15 = arith.muli %13, %14 : vector<9x128xi32>
    %c16_i32_3 = arith.constant 16 : i32
    %16 = vector.broadcast %c16_i32_3 : i32 to vector<9x128xi32>
    %17 = arith.shrui %15, %16 : vector<9x128xi32>
    %18 = arith.xori %15, %17 : vector<9x128xi32>
    %c2147483647_i32 = arith.constant 2147483647 : i32
    %19 = vector.broadcast %c2147483647_i32 : i32 to vector<9x128xi32>
    %20 = arith.andi %18, %19 : vector<9x128xi32>
    %21 = arith.sitofp %20 : vector<9x128xi32> to vector<9x128xf32>
    %cst = arith.constant 4.65661287E-10 : f32
    %22 = vector.broadcast %cst : f32 to vector<9x128xf32>
    %23 = arith.mulf %21, %22 : vector<9x128xf32>
    %cst_4 = arith.constant 1.500000e+01 : f32
    %24 = vector.broadcast %cst_4 : f32 to vector<9x128xf32>
    %25 = arith.mulf %23, %24 : vector<9x128xf32>
    %26 = arith.fptosi %25 : vector<9x128xf32> to vector<9x128xi32>
    %c14_i32 = arith.constant 14 : i32
    %27 = vector.broadcast %c14_i32 : i32 to vector<9x128xi32>
    %28 = arith.minsi %26, %27 : vector<9x128xi32>
    %c1_i32 = arith.constant 1 : i32
    %29 = vector.broadcast %c1_i32 : i32 to vector<9x128xi32>
    %30 = arith.addi %29, %28 : vector<9x128xi32>
    %c8_i32 = arith.constant 8 : i32
    %31 = vector.broadcast %c8_i32 : i32 to vector<9x128xi32>
    %32 = arith.cmpi slt, %0, %31 : vector<9x128xi32>
    %c0_i32 = arith.constant 0 : i32
    %33 = vector.broadcast %c0_i32 : i32 to vector<9x128xi32>
    %34 = arith.select %32, %30, %33 : vector<9x128xi1>, vector<9x128xi32>
    %c0_5 = arith.constant 0 : index
    %c0_6 = arith.constant 0 : index
    %35 = vector.load %arg2[%c0_5, %c0_6] : memref<9x128xi32, #tpu.memory_space<vmem>>, vector<9x128xi32>
    tpu.vector_store %arg2[%c0_5, %c0_6], %34 {strides = array<i32>} : memref<9x128xi32, #tpu.memory_space<vmem>>, vector<9x128xi32>,
    return
  }
  func.func @transform_0(%arg0: i32) -> (i32, i32) {
    %c0_i32 = arith.constant 0 : i32
    %c0_i32_0 = arith.constant 0 : i32
    return %c0_i32, %arg0 : i32, i32
  }
  func.func @transform_1(%arg0: i32) -> (i32, i32) {
    %c0_i32 = arith.constant 0 : i32
    %c0_i32_0 = arith.constant 0 : i32
    return %c0_i32, %arg0 : i32, i32
  }
}

</mosaic_0001>

<llo_original>
// kernel: random_sender_forward.1
$region0: #{random_sender_forward.1}
  #allocation0 [shape = 'u32[]', space=smem, size = 0x4, offset = 0x4, fixed_abs, tag = 'smem constant byte address 0x4 - core index']
  #allocation1 [shape = 'u32[144,128]{1,0:T(1,128)}', space=vmem, size = 0x12000, scoped, tag = 'internal scratch']
  %s0 = inlined_call_operand.vmem [shape: u32[1,128], index: 0, kind: input, shape index: {}]
  %s1 = inlined_call_operand.vmem [shape: s32[9,128], index: 1, kind: output, shape index: {}]
  %s2 = sld [smem:[#allocation0]]
  $region14: #{random_sender_forward.1} parent=0
    _
  %s4 = ssub.s32 1, %s2
  %s5 = scalar_select 0, %s4, %s2
  // Predicated region
  $region2: #{random_sender_forward.1} parent=0 // pred_check
    _
  $region3: #{random_sender_forward.1} parent=0 // pred_check_branch
    %7 = sbr.rel (0) target = $region5
  $region4: #{random_sender_forward.1} parent=0 // pred_region
    _
  $region5: #{random_sender_forward.1} parent=0 // pred_fallthru
    _
  %v8 = vlaneseq
  %v9 = vshrl.u32 %v8, 7
  %v10 = vadd.s32 %v9, 8
  %v11 = vld [vmem:[%s0] sm:$0x1]
  %v12 = vmul.u32 %v9, 2654435769
  %v13 = vmul.u32 %v10, 2654435769
  %v14 = vlaneseq
  %v15 = vshrl.u32 %v14, 7
  %v16 = vsub.s32 0, %v15
  %v17 = vrot.slane %v11, %v16
  %v18 = vadd.s32 %v17, %v12
  %v19 = vadd.s32 %v17, %v13
  %v20 = vshrl.u32 %v18, 16
  %v21 = vshrl.u32 %v19, 16
  %v22 = vxor.u32 %v18, %v20
  %v23 = vxor.u32 %v19, %v21
  %v24 = vmul.u32 %v22, 73244475
  %v25 = vmul.u32 %v23, 73244475
  %v26 = vshrl.u32 %v24, 16
  %v27 = vshrl.u32 %v25, 16
  %v28 = vxor.u32 %v24, %v26
  %v29 = vxor.u32 %v25, %v27
  %v30 = vmul.u32 %v28, 73244475
  %v31 = vmul.u32 %v29, 73244475
  %v32 = vshrl.u32 %v30, 16
  %v33 = vshrl.u32 %v31, 16
  %v34 = vxor.u32 %v30, %v32
  %v35 = vxor.u32 %v31, %v33
  %v36 = vand.u32 %v34, 2147483647
  %v37 = vand.u32 %v35, 2147483647
  %v38 = vcvt.s32.f32 %v36
  %v39 = vcvt.s32.f32 %v37
  %v40 = vmul.f32 %v38, 4.656613e-10
  %v41 = vmul.f32 %v39, 4.656613e-10
  %v42 = vmul.f32 %v40, 15.0
  %v43 = vmul.f32 %v41, 15.0
  %v44 = vcvt.f32.s32.to.zero.pseudo %v42
  %v45 = vcvt.f32.s32.to.zero.pseudo %v43
  %vm46 = vcmp.lt.s32.totalorder %v44, 14
  %v47 = vsel %vm46, %v44, 14
  %vm48 = vcmp.lt.s32.totalorder %v45, 14
  %v49 = vsel %vm48, %v45, 14
  %v50 = vadd.s32 %v47, 1
  %v51 = vadd.s32 %v49, 1
  %vm52 = vcmp.lt.s32.totalorder %v9, 8
  %vm53 = vcmp.lt.s32.totalorder %v10, 8
  %v54 = vsel %vm52, %v50, 0
  %v55 = vsel %vm53, %v51, 0
  %56 = vst [vmem:[%s1] sm:$0xff] %v54
  %57 = vst [vmem:[%s1 + $0x8] sm:$0x1] %v55
  // Predicated region
  $region6: #{random_sender_forward.1} parent=0 // pred_check
    _
  $region7: #{random_sender_forward.1} parent=0 // pred_check_branch
    %59 = sbr.rel (0) target = $region9
  $region8: #{random_sender_forward.1} parent=0 // pred_region
    _
  $region9: #{random_sender_forward.1} parent=0 // pred_fallthru
    _
  // Predicated region
  $region10: #{random_sender_forward.1} parent=0 // pred_check
    _
  $region11: #{random_sender_forward.1} parent=0 // pred_check_branch
    %61 = sbr.rel (0) target = $region13
  $region12: #{random_sender_forward.1} parent=0 // pred_region
    _
  $region13: #{random_sender_forward.1} parent=0 // pred_fallthru
    _

</llo_original>
